<compile_context>
chip_gen: v6e
topology: v6e:2x2x1
jax: 0.10.0
libtpu: 0.0.40
codegen_flags: <defaults>
</compile_context>

<pallas_src>
import math

import jax
import jax.numpy as jnp
import numpy as np
from jax.experimental import pallas as pl
from jax.experimental.pallas import tpu as pltpu


# ----------------------------- config ---------------------------------------
D_MODEL = 32
N_OUT = 2                 # skim predictor emits 2 logits per token
OUT_PAD = 128             # lane-dense padded width for the final logits
LAYER_NORM_EPS = 1e-6
B = 2
S = 8


# ------------------------------ in-kernel math -------------------------------
def _erf(x):
    # Abramowitz & Stegun 7.1.26, max abs error 1.5e-7 (well inside f32 + test tol).
    p = 0.3275911
    a1, a2, a3, a4, a5 = (0.254829592, -0.284496736, 1.421413741,
                          -1.453152027, 1.061405429)
    ax = jnp.abs(x)
    t = 1.0 / (1.0 + p * ax)
    poly = ((((a5 * t + a4) * t + a3) * t + a2) * t + a1) * t
    y = 1.0 - poly * jnp.exp(-ax * ax)
    return jnp.where(x < 0.0, -y, y)


def _gelu_exact(x):
    # nn.GELU() default (approximate='none'): exact erf-based GELU.
    return 0.5 * x * (1.0 + _erf(x * (1.0 / math.sqrt(2.0))))


# ------------------------------- Pallas kernel -------------------------------
def self_skimmer_kernel(x_ref, g1_ref, w1_ref, b1_ref, g2_ref, w2_ref,
                        b2_ref, out_ref):
    x = x_ref[...]                                          # (B*S, D)

    # --- T5LayerNorm #1 (RMS norm: no mean subtraction, no bias) ---
    var1 = jnp.mean(x * x, axis=-1, keepdims=True)
    h = x * jax.lax.rsqrt(var1 + LAYER_NORM_EPS) * g1_ref[...]

    # --- Linear(d_model, d_model) ---
    h = jnp.dot(h, w1_ref[...], preferred_element_type=jnp.float32) + b1_ref[...]

    # --- T5LayerNorm #2 ---
    var2 = jnp.mean(h * h, axis=-1, keepdims=True)
    h = h * jax.lax.rsqrt(var2 + LAYER_NORM_EPS) * g2_ref[...]

    # --- GELU (exact) ---
    h = _gelu_exact(h)

    # --- Linear(d_model, 2) zero-padded to 128 lanes -> unmasked dense store ---
    y = jnp.dot(h, w2_ref[...], preferred_element_type=jnp.float32) + b2_ref[...]
    out_ref[...] = y.astype(out_ref.dtype)


@jax.jit
def self_skimmer(hidden_states, gamma1, w1, b1, gamma2, w2_pad, b2_pad):
    Bn, Sn, Dn = hidden_states.shape
    x2d = hidden_states.reshape(Bn * Sn, Dn)                # fold batch into rows
    vmem = pl.BlockSpec(memory_space=pltpu.MemorySpace.VMEM)
    out = pl.pallas_call(
        self_skimmer_kernel,
        out_shape=jax.ShapeDtypeStruct((Bn * Sn, OUT_PAD), jnp.float32),
        in_specs=[vmem] * 7,
        out_specs=vmem,
    )(x2d, gamma1, w1, b1, gamma2, w2_pad, b2_pad)
    return out[:, :N_OUT].reshape(Bn, Sn, N_OUT)


# ---------------------------- pure-JAX reference ------------------------------
def reference(hidden_states, gamma1, w1, b1, gamma2, w2, b2):
    x = hidden_states
    h = x * jax.lax.rsqrt(jnp.mean(x * x, -1, keepdims=True) + LAYER_NORM_EPS)
    h = h * gamma1[0]
    h = jnp.dot(h, w1, precision=jax.lax.Precision.HIGHEST) + b1[0]
    h = h * jax.lax.rsqrt(jnp.mean(h * h, -1, keepdims=True) + LAYER_NORM_EPS)
    h = h * gamma2[0]
    h = jax.nn.gelu(h, approximate=False)                    # exact erf GELU
    return jnp.dot(h, w2, precision=jax.lax.Precision.HIGHEST) + b2


# ------------------------------------ main ------------------------------------
if __name__ == "__main__":
    key = jax.random.PRNGKey(0)
    kx, kg1, kw1, kb1, kg2, kw2, kb2 = jax.random.split(key, 7)

    hidden_states = jax.random.normal(kx, (B, S, D_MODEL), dtype=jnp.float32)

    # Parameters (shapes from SelfSkimmer.__init__; linear weights are stored
    # pre-transposed as [in, out] so the kernel computes y = x @ W).
    gamma1 = 1.0 + 0.02 * jax.random.normal(kg1, (1, D_MODEL), dtype=jnp.float32)
    w1 = 0.05 * jax.random.normal(kw1, (D_MODEL, D_MODEL), dtype=jnp.float32)
    b1 = 0.05 * jax.random.normal(kb1, (1, D_MODEL), dtype=jnp.float32)
    gamma2 = 1.0 + 0.02 * jax.random.normal(kg2, (1, D_MODEL), dtype=jnp.float32)

    # init_skim_predictor: W ~ N(0, 0.02); bias[0] ~ N(-5, 0.02), bias[1] ~ N(5, 0.02).
    w2 = 0.02 * jax.random.normal(kw2, (D_MODEL, N_OUT), dtype=jnp.float32)
    b2 = (jnp.array([-5.0, 5.0], dtype=jnp.float32)
          + 0.02 * jax.random.normal(kb2, (N_OUT,), dtype=jnp.float32))

    # Lane-dense padding of the final projection (columns 2..127 are zero).
    w2_pad = jnp.zeros((D_MODEL, OUT_PAD), jnp.float32).at[:, :N_OUT].set(w2)
    b2_pad = jnp.zeros((1, OUT_PAD), jnp.float32).at[0, :N_OUT].set(b2)

    out = self_skimmer(hidden_states, gamma1, w1, b1, gamma2, w2_pad, b2_pad)
    out = jax.block_until_ready(out)

    ref = jax.block_until_ready(
        reference(hidden_states, gamma1, w1, b1, gamma2, w2, b2))
    np.testing.assert_allclose(np.asarray(out), np.asarray(ref),
                               rtol=1e-4, atol=1e-4)

    print("KERNEL_OK")
</pallas_src>

<mosaic_0001>
module attributes {stable_mosaic.version = 11 : i64} {
  func.func @self_skimmer_kernel(%arg0: memref<16x32xf32, #tpu.memory_space<vmem>>, %arg1: memref<1x32xf32, #tpu.memory_space<vmem>>, %arg2: memref<32x32xf32, #tpu.memory_space<vmem>>, %arg3: memref<1x32xf32, #tpu.memory_space<vmem>>, %arg4: memref<1x32xf32, #tpu.memory_space<vmem>>, %arg5: memref<32x128xf32, #tpu.memory_space<vmem>>, %arg6: memref<1x128xf32, #tpu.memory_space<vmem>>, %arg7: memref<16x128xf32, #tpu.memory_space<vmem>>) attributes {dimension_semantics = [], scalar_prefetch = 0 : i64, scratch_operands = 0 : i64, tpu.core_type = #tpu.core_type<tc>} {
    %c0 = arith.constant 0 : index
    %c0_0 = arith.constant 0 : index
    %0 = vector.load %arg0[%c0, %c0_0] : memref<16x32xf32, #tpu.memory_space<vmem>>, vector<16x32xf32>
    %1 = arith.mulf %0, %0 : vector<16x32xf32>
    %cst = arith.constant dense<0.000000e+00> : vector<16xf32>
    %2 = vector.multi_reduction <add>, %1, %cst [1] : vector<16x32xf32> to vector<16xf32>
    %3 = vector.shape_cast %2 : vector<16xf32> to vector<16x1xf32>
    %cst_1 = arith.constant 3.200000e+01 : f32
    %4 = vector.broadcast %cst_1 : f32 to vector<16x1xf32>
    %5 = arith.divf %3, %4 : vector<16x1xf32>
    %cst_2 = arith.constant 9.99999997E-7 : f32
    %6 = vector.broadcast %cst_2 : f32 to vector<16x1xf32>
    %7 = arith.addf %5, %6 : vector<16x1xf32>
    %8 = math.rsqrt %7 : vector<16x1xf32>
    %9 = vector.broadcast %8 : vector<16x1xf32> to vector<16x32xf32>
    %10 = arith.mulf %0, %9 : vector<16x32xf32>
    %c0_3 = arith.constant 0 : index
    %c0_4 = arith.constant 0 : index
    %11 = vector.load %arg1[%c0_3, %c0_4] : memref<1x32xf32, #tpu.memory_space<vmem>>, vector<1x32xf32>
    %12 = vector.broadcast %11 : vector<1x32xf32> to vector<16x32xf32>
    %13 = arith.mulf %10, %12 : vector<16x32xf32>
    %c0_5 = arith.constant 0 : index
    %c0_6 = arith.constant 0 : index
    %14 = vector.load %arg2[%c0_5, %c0_6] : memref<32x32xf32, #tpu.memory_space<vmem>>, vector<32x32xf32>
    %cst_7 = arith.constant dense<0.000000e+00> : vector<16x32xf32>
    %15 = tpu.matmul %13, %14, %cst_7 {dimension_numbers = #tpu.dot_dimension_numbers<[1], [0], [0], [1], [0, 0, 1, 1], [], []>} : vector<16x32xf32>, vector<32x32xf32>, vector<16x32xf32> -> vector<16x32xf32>
    %c0_8 = arith.constant 0 : index
    %c0_9 = arith.constant 0 : index
    %16 = vector.load %arg3[%c0_8, %c0_9] : memref<1x32xf32, #tpu.memory_space<vmem>>, vector<1x32xf32>
    %17 = vector.broadcast %16 : vector<1x32xf32> to vector<16x32xf32>
    %18 = arith.addf %15, %17 : vector<16x32xf32>
    %19 = arith.mulf %18, %18 : vector<16x32xf32>
    %cst_10 = arith.constant dense<0.000000e+00> : vector<16xf32>
    %20 = vector.multi_reduction <add>, %19, %cst_10 [1] : vector<16x32xf32> to vector<16xf32>
    %21 = vector.shape_cast %20 : vector<16xf32> to vector<16x1xf32>
    %cst_11 = arith.constant 3.200000e+01 : f32
    %22 = vector.broadcast %cst_11 : f32 to vector<16x1xf32>
    %23 = arith.divf %21, %22 : vector<16x1xf32>
    %cst_12 = arith.constant 9.99999997E-7 : f32
    %24 = vector.broadcast %cst_12 : f32 to vector<16x1xf32>
    %25 = arith.addf %23, %24 : vector<16x1xf32>
    %26 = math.rsqrt %25 : vector<16x1xf32>
    %27 = vector.broadcast %26 : vector<16x1xf32> to vector<16x32xf32>
    %28 = arith.mulf %18, %27 : vector<16x32xf32>
    %c0_13 = arith.constant 0 : index
    %c0_14 = arith.constant 0 : index
    %29 = vector.load %arg4[%c0_13, %c0_14] : memref<1x32xf32, #tpu.memory_space<vmem>>, vector<1x32xf32>
    %30 = vector.broadcast %29 : vector<1x32xf32> to vector<16x32xf32>
    %31 = arith.mulf %28, %30 : vector<16x32xf32>
    %cst_15 = arith.constant 5.000000e-01 : f32
    %32 = vector.broadcast %cst_15 : f32 to vector<16x32xf32>
    %33 = arith.mulf %32, %31 : vector<16x32xf32>
    %cst_16 = arith.constant 0.707106769 : f32
    %34 = vector.broadcast %cst_16 : f32 to vector<16x32xf32>
    %35 = arith.mulf %31, %34 : vector<16x32xf32>
    %36 = math.absf %35 : vector<16x32xf32>
    %cst_17 = arith.constant 0.327591091 : f32
    %37 = vector.broadcast %cst_17 : f32 to vector<16x32xf32>
    %38 = arith.mulf %37, %36 : vector<16x32xf32>
    %cst_18 = arith.constant 1.000000e+00 : f32
    %39 = vector.broadcast %cst_18 : f32 to vector<16x32xf32>
    %40 = arith.addf %39, %38 : vector<16x32xf32>
    %cst_19 = arith.constant 1.000000e+00 : f32
    %41 = vector.broadcast %cst_19 : f32 to vector<16x32xf32>
    %42 = arith.divf %41, %40 : vector<16x32xf32>
    %cst_20 = arith.constant 1.06140542 : f32
    %43 = vector.broadcast %cst_20 : f32 to vector<16x32xf32>
    %44 = arith.mulf %43, %42 : vector<16x32xf32>
    %cst_21 = arith.constant -1.45315206 : f32
    %45 = vector.broadcast %cst_21 : f32 to vector<16x32xf32>
    %46 = arith.addf %44, %45 : vector<16x32xf32>
    %47 = arith.mulf %46, %42 : vector<16x32xf32>
    %cst_22 = arith.constant 1.42141378 : f32
    %48 = vector.broadcast %cst_22 : f32 to vector<16x32xf32>
    %49 = arith.addf %47, %48 : vector<16x32xf32>
    %50 = arith.mulf %49, %42 : vector<16x32xf32>
    %cst_23 = arith.constant -0.284496725 : f32
    %51 = vector.broadcast %cst_23 : f32 to vector<16x32xf32>
    %52 = arith.addf %50, %51 : vector<16x32xf32>
    %53 = arith.mulf %52, %42 : vector<16x32xf32>
    %cst_24 = arith.constant 0.254829586 : f32
    %54 = vector.broadcast %cst_24 : f32 to vector<16x32xf32>
    %55 = arith.addf %53, %54 : vector<16x32xf32>
    %56 = arith.mulf %55, %42 : vector<16x32xf32>
    %cst_25 = arith.constant 0.000000e+00 : f32
    %57 = vector.broadcast %cst_25 : f32 to vector<16x32xf32>
    %58 = arith.subf %57, %36 : vector<16x32xf32>
    %59 = arith.mulf %58, %36 : vector<16x32xf32>
    %60 = math.exp %59 : vector<16x32xf32>
    %61 = arith.mulf %56, %60 : vector<16x32xf32>
    %cst_26 = arith.constant 1.000000e+00 : f32
    %62 = vector.broadcast %cst_26 : f32 to vector<16x32xf32>
    %63 = arith.subf %62, %61 : vector<16x32xf32>
    %cst_27 = arith.constant 0.000000e+00 : f32
    %64 = vector.broadcast %cst_27 : f32 to vector<16x32xf32>
    %65 = arith.cmpf olt, %35, %64 : vector<16x32xf32>
    %cst_28 = arith.constant 0.000000e+00 : f32
    %66 = vector.broadcast %cst_28 : f32 to vector<16x32xf32>
    %67 = arith.subf %66, %63 : vector<16x32xf32>
    %68 = arith.select %65, %67, %63 : vector<16x32xi1>, vector<16x32xf32>
    %cst_29 = arith.constant 1.000000e+00 : f32
    %69 = vector.broadcast %cst_29 : f32 to vector<16x32xf32>
    %70 = arith.addf %69, %68 : vector<16x32xf32>
    %71 = arith.mulf %33, %70 : vector<16x32xf32>
    %c0_30 = arith.constant 0 : index
    %c0_31 = arith.constant 0 : index
    %72 = vector.load %arg5[%c0_30, %c0_31] : memref<32x128xf32, #tpu.memory_space<vmem>>, vector<32x128xf32>
    %cst_32 = arith.constant dense<0.000000e+00> : vector<16x128xf32>
    %73 = tpu.matmul %71, %72, %cst_32 {dimension_numbers = #tpu.dot_dimension_numbers<[1], [0], [0], [1], [0, 0, 1, 1], [], []>} : vector<16x32xf32>, vector<32x128xf32>, vector<16x128xf32> -> vector<16x128xf32>
    %c0_33 = arith.constant 0 : index
    %c0_34 = arith.constant 0 : index
    %74 = vector.load %arg6[%c0_33, %c0_34] : memref<1x128xf32, #tpu.memory_space<vmem>>, vector<1x128xf32>
    %75 = vector.broadcast %74 : vector<1x128xf32> to vector<16x128xf32>
    %76 = arith.addf %73, %75 : vector<16x128xf32>
    %c0_35 = arith.constant 0 : index
    %c0_36 = arith.constant 0 : index
    %77 = vector.load %arg7[%c0_35, %c0_36] : memref<16x128xf32, #tpu.memory_space<vmem>>, vector<16x128xf32>
    tpu.vector_store %arg7[%c0_35, %c0_36], %76 {strides = array<i32>} : memref<16x128xf32, #tpu.memory_space<vmem>>, vector<16x128xf32>,
    return
  }
}

</mosaic_0001>

<llo_original>
// kernel: self_skimmer.1
$region0: #{self_skimmer.1}
  #allocation0 [shape = 'u32[]', space=smem, size = 0x4, offset = 0x4, fixed_abs, tag = 'smem constant byte address 0x4 - core index']
  #allocation1 [shape = 'u32[144,128]{1,0:T(1,128)}', space=vmem, size = 0x12000, scoped, tag = 'internal scratch']
  %s0 = inlined_call_operand.hbm [shape: f32[16,32], index: 0, kind: input, shape index: {}]
  %s1 = inlined_call_operand.vmem [shape: f32[1,32], index: 1, kind: input, shape index: {}]
  %s2 = inlined_call_operand.hbm [shape: f32[32,32], index: 2, kind: input, shape index: {}]
  %s3 = inlined_call_operand.vmem [shape: f32[1,32], index: 3, kind: input, shape index: {}]
  %s4 = inlined_call_operand.vmem [shape: f32[1,32], index: 4, kind: input, shape index: {}]
  %s5 = inlined_call_operand.hbm [shape: f32[32,128], index: 5, kind: input, shape index: {}]
  %s6 = inlined_call_operand.vmem [shape: f32[1,128], index: 6, kind: input, shape index: {}]
  %s7 = inlined_call_operand.vmem [shape: f32[16,128], index: 7, kind: output, shape index: {}]
  %s8 = sld [smem:[#allocation0]]
  $region50: #{self_skimmer.1} parent=0
    _
  %s10 = ssub.s32 1, %s8
  %s11 = scalar_select 0, %s10, %s8
  $region1: #{self_skimmer.1} parent=0
    #allocation2 [shape = 'u8[8192]{0}', space=vmem, size = 0x2000, scoped, tag = 'input window, operand 0, single buffered']
    #allocation3 [shape = 's32[1]{0}', space=sflag, size = 0x4, scoped, tag = 'scoped memory for self_skimmer.1']
    #allocation4 [shape = 'u8[16384]{0}', space=vmem, size = 0x4000, scoped, tag = 'input window, operand 2, single buffered']
    #allocation5 [shape = 's32[1]{0}', space=sflag, size = 0x4, scoped, tag = 'scoped memory for self_skimmer.1']
    #allocation6 [shape = 'u8[16384]{0}', space=vmem, size = 0x4000, scoped, tag = 'input window, operand 5, single buffered']
    %12 = vsyncpa [#allocation3], 0
    %13 = vsyncpa [#allocation5], 0
    // Predicated region
    $region2: #{self_skimmer.1} parent=1 // pred_check
      _
    $region3: #{self_skimmer.1} parent=1 // pred_check_branch
      %15 = sbr.rel (0) target = $region5
    $region4: #{self_skimmer.1} parent=1 // pred_region
      %s17 = ssub.s32 256, 256
      %18 = vsyncadd [#allocation3], %s17
      %s19 = sshll.u32 [#allocation2], 4
      %s20 = int_to_ptr.vmem [resolvable:$true] %s19
      %25 = dma.hbm_to_vmem [thread:$0]  %s0, 256, %s20, [#allocation3], 128, 128, 8
    $region5: #{self_skimmer.1} parent=1 // pred_fallthru
      _
    // Predicated region
    $region6: #{self_skimmer.1} parent=1 // pred_check
      _
    $region7: #{self_skimmer.1} parent=1 // pred_check_branch
      %27 = sbr.rel (0) target = $region9
    $region8: #{self_skimmer.1} parent=1 // pred_region
      _
    $region9: #{self_skimmer.1} parent=1 // pred_fallthru
      _
    // Predicated region
    $region10: #{self_skimmer.1} parent=1 // pred_check
      _
    $region11: #{self_skimmer.1} parent=1 // pred_check_branch
      %29 = sbr.rel (0) target = $region13
    $region12: #{self_skimmer.1} parent=1 // pred_region
      %s31 = ssub.s32 512, 512
      %32 = vsyncadd [#allocation5], %s31
      %s33 = sshll.u32 [#allocation4], 4
      %s34 = int_to_ptr.vmem [resolvable:$true] %s33
      %39 = dma.hbm_to_vmem [thread:$0]  %s2, 512, %s34, [#allocation5], 128, 128, 8
    $region13: #{self_skimmer.1} parent=1 // pred_fallthru
      _
    // Predicated region
    $region14: #{self_skimmer.1} parent=1 // pred_check
      _
    $region15: #{self_skimmer.1} parent=1 // pred_check_branch
      %41 = sbr.rel (0) target = $region17
    $region16: #{self_skimmer.1} parent=1 // pred_region
      _
    $region17: #{self_skimmer.1} parent=1 // pred_fallthru
      _
    // Predicated region
    $region18: #{self_skimmer.1} parent=1 // pred_check
      _
    $region19: #{self_skimmer.1} parent=1 // pred_check_branch
      %43 = sbr.rel (0) target = $region21
    $region20: #{self_skimmer.1} parent=1 // pred_region
      _
    $region21: #{self_skimmer.1} parent=1 // pred_fallthru
      _
    // Predicated region
    $region22: #{self_skimmer.1} parent=1 // pred_check
      _
    $region23: #{self_skimmer.1} parent=1 // pred_check_branch
      %45 = sbr.rel (0) target = $region25
    $region24: #{self_skimmer.1} parent=1 // pred_region
      %s47 = ssub.s32 512, 512
      %48 = vsyncadd [#allocation5], %s47
      %s49 = sshll.u32 [#allocation6], 4
      %s50 = int_to_ptr.vmem [resolvable:$true] %s49
      %55 = dma.hbm_to_vmem [thread:$0]  %s5, 512, %s50, [#allocation5], 128, 128, 8
    $region25: #{self_skimmer.1} parent=1 // pred_fallthru
      _
    // Predicated region
    $region26: #{self_skimmer.1} parent=1 // pred_check
      _
    $region27: #{self_skimmer.1} parent=1 // pred_check_branch
      %57 = sbr.rel (0) target = $region29
    $region28: #{self_skimmer.1} parent=1 // pred_region
      _
    $region29: #{self_skimmer.1} parent=1 // pred_fallthru
      _
    // Predicated region
    $region30: #{self_skimmer.1} parent=1 // pred_check
      _
    $region31: #{self_skimmer.1} parent=1 // pred_check_branch
      %59 = sbr.rel (0) target = $region33
    $region32: #{self_skimmer.1} parent=1 // pred_region
      %60 = dma.done [#allocation3], 256
    $region33: #{self_skimmer.1} parent=1 // pred_fallthru
      _
    // Predicated region
    $region34: #{self_skimmer.1} parent=1 // pred_check
      _
    $region35: #{self_skimmer.1} parent=1 // pred_check_branch
      %62 = sbr.rel (0) target = $region37
    $region36: #{self_skimmer.1} parent=1 // pred_region
      %63 = dma.done [#allocation5], 512
    $region37: #{self_skimmer.1} parent=1 // pred_fallthru
      _
    // Predicated region
    $region38: #{self_skimmer.1} parent=1 // pred_check
      _
    $region39: #{self_skimmer.1} parent=1 // pred_check_branch
      %65 = sbr.rel (0) target = $region41
    $region40: #{self_skimmer.1} parent=1 // pred_region
      %66 = dma.done [#allocation5], 512
    $region41: #{self_skimmer.1} parent=1 // pred_fallthru
      _
    %v67 = vld [vmem:[#allocation2] sm:$0xff]
    %v68 = vld [vmem:[#allocation2 + $0x8] sm:$0xff]
    %v69 = vmul.f32 %v67, %v67
    %v70 = vmul.f32 %v68, %v68
    %vm71 = vcmask 261120
    %v72 = vsel %vm71, %v69, 0.0
    %73 = vadd.xlane.f32.xlu0 %v72
    %v74 = vpop.xlane.xlu0 %73
    %v75 = vsel %vm71, %v70, 0.0
    %76 = vadd.xlane.f32.xlu0 %v75
    %v77 = vpop.xlane.xlu0 %76
    %v78 = vrcp.pop 32.0
    %v79 = vmul.f32 %v74, %v78
    %v80 = vmul.f32 %v77, %v78
    %v81 = vadd.f32 %v79, 1e-06
    %v82 = vadd.f32 %v80, 1e-06
    %v83 = vrsqrt.pop %v81
    %v84 = vrsqrt.pop %v82
    %v85 = vmul.f32 %v67, %v83
    %v86 = vmul.f32 %v68, %v84
    %v87 = vld [vmem:[%s1] sm:$0x1]
    %v89 = vlaneseq
    %v90 = vshrl.u32 %v89, 7
    %v91 = vsub.s32 0, %v90
    %v92 = vrot.slane %v87, %v91
    %v94 = vmul.f32 %v85, %v92
    %v95 = vmul.f32 %v86, %v92
    %v96 = vld [vmem:[#allocation4] sm:$0xff]
    %v97 = vld [vmem:[#allocation4 + $0x8] sm:$0xff]
    %v98 = vld [vmem:[#allocation4 + $0x10] sm:$0xff]
    %v99 = vld [vmem:[#allocation4 + $0x18] sm:$0xff]
    %v100 = vld [vmem:[%s3] sm:$0x1]
    %v102 = vlaneseq
    %v103 = vshrl.u32 %v102, 7
    %v104 = vsub.s32 0, %v103
    %v105 = vrot.slane %v100, %v104
    %v108 = vsel %vm71, %v94, 0
    %v111 = vsel %vm71, %v95, 0
    %113 = vmatprep.subr.mxu0 0.0
    %114 = vmatpush1.msra.mxu0 0.0
    %115 = vmatprep.subr.mxu0 0.0
    %116 = vmatpush1.msra.mxu0 0.0
    %117 = vmatprep.subr.mxu0 0.0
    %118 = vmatpush1.msra.mxu0 0.0
    %119 = vmatprep.subr.mxu0 0.0
    %120 = vmatpush1.msra.mxu0 0.0
    %121 = vmatprep.subr.mxu0 0.0
    %122 = vmatpush1.msra.mxu0 0.0
    %123 = vmatprep.subr.mxu0 0.0
    %124 = vmatpush1.msra.mxu0 0.0
    %125 = vmatprep.subr.mxu0 0.0
    %126 = vmatpush1.msra.mxu0 0.0
    %127 = vmatprep.subr.mxu0 0.0
    %128 = vmatpush1.msra.mxu0 0.0
    %129 = vmatprep.subr.mxu0 0.0
    %130 = vmatpush1.msra.mxu0 0.0
    %131 = vmatprep.subr.mxu0 0.0
    %132 = vmatpush1.msra.mxu0 0.0
    %133 = vmatprep.subr.mxu0 0.0
    %134 = vmatpush1.msra.mxu0 0.0
    %135 = vmatprep.subr.mxu0 0.0
    %136 = vmatpush1.msra.mxu0 0.0
    %137 = vmatprep.subr.mxu0 0.0
    %138 = vmatpush1.msra.mxu0 %v99
    %139 = vmatprep.subr.mxu0 0.0
    %140 = vmatpush1.msra.mxu0 %v98
    %141 = vmatprep.subr.mxu0 0.0
    %142 = vmatpush1.msra.mxu0 %v97
    %143 = vmatprep.subr.mxu0 0.0
    %144 = vmatpush1.msra.mxu0 %v96
    %145 = vmatprep.subr.mxu0 0.0
    %146 = vmatpush2.msra.mxu0 0.0
    %147 = vmatprep.subr.mxu0 0.0
    %148 = vmatpush2.msra.mxu0 0.0
    %149 = vmatprep.subr.mxu0 0.0
    %150 = vmatpush2.msra.mxu0 0.0
    %151 = vmatprep.subr.mxu0 0.0
    %152 = vmatpush2.msra.mxu0 0.0
    %153 = vmatprep.subr.mxu0 0.0
    %154 = vmatpush2.msra.mxu0 0.0
    %155 = vmatprep.subr.mxu0 0.0
    %156 = vmatpush2.msra.mxu0 0.0
    %157 = vmatprep.subr.mxu0 0.0
    %158 = vmatpush2.msra.mxu0 0.0
    %159 = vmatprep.subr.mxu0 0.0
    %160 = vmatpush2.msra.mxu0 0.0
    %161 = vmatprep.subr.mxu0 0.0
    %162 = vmatpush2.msra.mxu0 0.0
    %163 = vmatprep.subr.mxu0 0.0
    %164 = vmatpush2.msra.mxu0 0.0
    %165 = vmatprep.subr.mxu0 0.0
    %166 = vmatpush2.msra.mxu0 0.0
    %167 = vmatprep.subr.mxu0 0.0
    %168 = vmatpush2.msra.mxu0 0.0
    %169 = vmatprep.subr.mxu0 0.0
    %170 = vmatpush2.msra.mxu0 0.0
    %171 = vmatprep.subr.mxu0 0.0
    %172 = vmatpush2.msra.mxu0 0.0
    %173 = vmatprep.subr.mxu0 0.0
    %174 = vmatpush2.msra.mxu0 0.0
    %175 = vmatprep.subr.mxu0 0.0
    %176 = vmatpush2.msra.mxu0 0.0
    %177 = vmatprep.mubr.f32.mxu0 0.0
    %178 = vmatmul.mubr.f32.gmra.mxu0 %v108
    %v179 = vpop.f32.mrf.mxu0
    %v180 = vadd.f32 %v105, %v179
    %v181 = vpop.f32.mrf.mxu0
    %182 = vmatprep.mubr.f32.mxu0 0.0
    %183 = vmatmul.mubr.f32.gmra.mxu0 %v111
    %v184 = vpop.f32.mrf.mxu0
    %v185 = vadd.f32 %v105, %v184
    %v186 = vpop.f32.mrf.mxu0
    %187 = vdwg.mxu0
    %v188 = vmul.f32 %v180, %v180
    %v189 = vmul.f32 %v185, %v185
    %v190 = vsel %vm71, %v188, 0.0
    %191 = vadd.xlane.f32.xlu0 %v190
    %v192 = vpop.xlane.xlu0 %191
    %v193 = vsel %vm71, %v189, 0.0
    %194 = vadd.xlane.f32.xlu0 %v193
    %v195 = vpop.xlane.xlu0 %194
    %v196 = vmul.f32 %v192, %v78
    %v197 = vmul.f32 %v195, %v78
    %v198 = vadd.f32 %v196, 1e-06
    %v199 = vadd.f32 %v197, 1e-06
    %v200 = vrsqrt.pop %v198
    %v201 = vrsqrt.pop %v199
    %v202 = vmul.f32 %v180, %v200
    %v203 = vmul.f32 %v185, %v201
    %v204 = vld [vmem:[%s4] sm:$0x1]
    %v206 = vlaneseq
    %v207 = vshrl.u32 %v206, 7
    %v208 = vsub.s32 0, %v207
    %v209 = vrot.slane %v204, %v208
    %v211 = vmul.f32 %v202, %v209
    %v212 = vmul.f32 %v203, %v209
    %v213 = vmul.f32 %v211, 0.5
    %v214 = vmul.f32 %v212, 0.5
    %v215 = vmul.f32 %v211, 0.70710677
    %v216 = vmul.f32 %v212, 0.70710677
    %v217 = vand.u32 2147483647, %v215
    %v218 = vand.u32 2147483647, %v216
    %v219 = vmul.f32 %v217, 0.3275911
    %v220 = vmul.f32 %v218, 0.3275911
    %v221 = vadd.f32 %v219, 1.0
    %v222 = vadd.f32 %v220, 1.0
    %v223 = vrcp.pop %v221
    %v224 = vmul.f32 1.0, %v223
    %v225 = vrcp.pop %v222
    %v226 = vmul.f32 1.0, %v225
    %v227 = vmul.f32 %v224, 1.0614054
    %v228 = vmul.f32 %v226, 1.0614054
    %v229 = vadd.f32 %v227, -1.4531521
    %v230 = vadd.f32 %v228, -1.4531521
    %v231 = vmul.f32 %v229, %v224
    %v232 = vmul.f32 %v230, %v226
    %v233 = vadd.f32 %v231, 1.4214138
    %v234 = vadd.f32 %v232, 1.4214138
    %v235 = vmul.f32 %v233, %v224
    %v236 = vmul.f32 %v234, %v226
    %v237 = vadd.f32 %v235, -0.28449672
    %v238 = vadd.f32 %v236, -0.28449672
    %v239 = vmul.f32 %v237, %v224
    %v240 = vmul.f32 %v238, %v226
    %v241 = vadd.f32 %v239, 0.2548296
    %v242 = vadd.f32 %v240, 0.2548296
    %v243 = vmul.f32 %v241, %v224
    %v244 = vmul.f32 %v242, %v226
    %v245 = vsub.f32 0.0, %v217
    %v246 = vsub.f32 0.0, %v218
    %v247 = vmul.f32 %v245, %v217
    %v248 = vmul.f32 %v246, %v218
    %v249 = vmul.f32 %v247, 1.442695
    %v250 = vpow.pop %v249
    %v251 = vmul.f32 %v248, 1.442695
    %v252 = vpow.pop %v251
    %v253 = vmul.f32 %v243, %v250
    %v254 = vmul.f32 %v244, %v252
    %v255 = vsub.f32 1.0, %v253
    %v256 = vsub.f32 1.0, %v254
    %vm257 = vcmp.lt.f32.partialorder %v215, 0.0
    %vm258 = vcmp.lt.f32.partialorder %v216, 0.0
    %v259 = vsub.f32 0.0, %v255
    %v260 = vsub.f32 0.0, %v256
    %v261 = vsel %vm257, %v259, %v255
    %v262 = vsel %vm258, %v260, %v256
    %v263 = vadd.f32 %v261, 1.0
    %v264 = vadd.f32 %v262, 1.0
    %v265 = vmul.f32 %v213, %v263
    %v266 = vmul.f32 %v214, %v264
    %v267 = vld [vmem:[#allocation6] sm:$0xff]
    %v268 = vld [vmem:[#allocation6 + $0x8] sm:$0xff]
    %v269 = vld [vmem:[#allocation6 + $0x10] sm:$0xff]
    %v270 = vld [vmem:[#allocation6 + $0x18] sm:$0xff]
    %v271 = vld [vmem:[%s6] sm:$0x1]
    %v273 = vlaneseq
    %v274 = vshrl.u32 %v273, 7
    %v275 = vsub.s32 0, %v274
    %v276 = vrot.slane %v271, %v275
    %v279 = vsel %vm71, %v265, 0
    %v282 = vsel %vm71, %v266, 0
    %284 = vmatprep.subr.mxu0 0.0
    %285 = vmatpush1.msra.mxu0 0.0
    %286 = vmatprep.subr.mxu0 0.0
    %287 = vmatpush1.msra.mxu0 0.0
    %288 = vmatprep.subr.mxu0 0.0
    %289 = vmatpush1.msra.mxu0 0.0
    %290 = vmatprep.subr.mxu0 0.0
    %291 = vmatpush1.msra.mxu0 0.0
    %292 = vmatprep.subr.mxu0 0.0
    %293 = vmatpush1.msra.mxu0 0.0
    %294 = vmatprep.subr.mxu0 0.0
    %295 = vmatpush1.msra.mxu0 0.0
    %296 = vmatprep.subr.mxu0 0.0
    %297 = vmatpush1.msra.mxu0 0.0
    %298 = vmatprep.subr.mxu0 0.0
    %299 = vmatpush1.msra.mxu0 0.0
    %300 = vmatprep.subr.mxu0 0.0
    %301 = vmatpush1.msra.mxu0 0.0
    %302 = vmatprep.subr.mxu0 0.0
    %303 = vmatpush1.msra.mxu0 0.0
    %304 = vmatprep.subr.mxu0 0.0
    %305 = vmatpush1.msra.mxu0 0.0
    %306 = vmatprep.subr.mxu0 0.0
    %307 = vmatpush1.msra.mxu0 0.0
    %308 = vmatprep.subr.mxu0 0.0
    %309 = vmatpush1.msra.mxu0 %v270
    %310 = vmatprep.subr.mxu0 0.0
    %311 = vmatpush1.msra.mxu0 %v269
    %312 = vmatprep.subr.mxu0 0.0
    %313 = vmatpush1.msra.mxu0 %v268
    %314 = vmatprep.subr.mxu0 0.0
    %315 = vmatpush1.msra.mxu0 %v267
    %316 = vmatprep.subr.mxu0 0.0
    %317 = vmatpush2.msra.mxu0 0.0
    %318 = vmatprep.subr.mxu0 0.0
    %319 = vmatpush2.msra.mxu0 0.0
    %320 = vmatprep.subr.mxu0 0.0
    %321 = vmatpush2.msra.mxu0 0.0
    %322 = vmatprep.subr.mxu0 0.0
    %323 = vmatpush2.msra.mxu0 0.0
    %324 = vmatprep.subr.mxu0 0.0
    %325 = vmatpush2.msra.mxu0 0.0
    %326 = vmatprep.subr.mxu0 0.0
    %327 = vmatpush2.msra.mxu0 0.0
    %328 = vmatprep.subr.mxu0 0.0
    %329 = vmatpush2.msra.mxu0 0.0
    %330 = vmatprep.subr.mxu0 0.0
    %331 = vmatpush2.msra.mxu0 0.0
    %332 = vmatprep.subr.mxu0 0.0
    %333 = vmatpush2.msra.mxu0 0.0
    %334 = vmatprep.subr.mxu0 0.0
    %335 = vmatpush2.msra.mxu0 0.0
    %336 = vmatprep.subr.mxu0 0.0
    %337 = vmatpush2.msra.mxu0 0.0
    %338 = vmatprep.subr.mxu0 0.0
    %339 = vmatpush2.msra.mxu0 0.0
    %340 = vmatprep.subr.mxu0 0.0
    %341 = vmatpush2.msra.mxu0 0.0
    %342 = vmatprep.subr.mxu0 0.0
    %343 = vmatpush2.msra.mxu0 0.0
    %344 = vmatprep.subr.mxu0 0.0
    %345 = vmatpush2.msra.mxu0 0.0
    %346 = vmatprep.subr.mxu0 0.0
    %347 = vmatpush2.msra.mxu0 0.0
    %348 = vmatprep.mubr.f32.mxu0 0.0
    %349 = vmatmul.mubr.f32.gmra.mxu0 %v279
    %v350 = vpop.f32.mrf.mxu0
    %v351 = vadd.f32 %v276, %v350
    %v352 = vpop.f32.mrf.mxu0
    %353 = vmatprep.mubr.f32.mxu0 0.0
    %354 = vmatmul.mubr.f32.gmra.mxu0 %v282
    %v355 = vpop.f32.mrf.mxu0
    %v356 = vadd.f32 %v276, %v355
    %v357 = vpop.f32.mrf.mxu0
    %358 = vdwg.mxu0
    %359 = vst [vmem:[%s7] sm:$0xff] %v351
    %360 = vst [vmem:[%s7 + $0x8] sm:$0xff] %v356
    // Predicated region
    $region42: #{self_skimmer.1} parent=1 // pred_check
      _
    $region43: #{self_skimmer.1} parent=1 // pred_check_branch
      %362 = sbr.rel (0) target = $region45
    $region44: #{self_skimmer.1} parent=1 // pred_region
      _
    $region45: #{self_skimmer.1} parent=1 // pred_fallthru
      _
    // Predicated region
    $region46: #{self_skimmer.1} parent=1 // pred_check
      _
    $region47: #{self_skimmer.1} parent=1 // pred_check_branch
      %364 = sbr.rel (0) target = $region49
    $region48: #{self_skimmer.1} parent=1 // pred_region
      _
    $region49: #{self_skimmer.1} parent=1 // pred_fallthru
      _
    %365 = vsyncpa [#allocation3], 1
    %366 = vsyncpa [#allocation5], 1

</llo_original>
